<compile_context>
chip_gen: v7x
topology: tpu7x:2x2x1
jax: 0.10.0
libtpu: 0.0.40
codegen_flags: <defaults>
</compile_context>

<pallas_src>
import functools

import jax
import jax.numpy as jnp
from jax.experimental import pallas as pl
from jax.experimental.pallas import tpu as pltpu


def _round_up(x: int, m: int) -> int:
    return (x + m - 1) // m * m


def _lm_head_kernel(x_ref, w_ref, o_ref, acc_ref):
    # Grid: (M tiles, V tiles, K tiles); K (hidden dim) is the reduction axis
    # and is innermost.  x_ref: (tm, tk) bf16, w_ref: (tn, tk) bf16 (native
    # [V, H] layout), o_ref: (tm, tn), acc_ref: (tm, tn) f32.
    @pl.when(pl.program_id(2) == 0)
    def _():
        acc_ref[...] = jnp.zeros_like(acc_ref)

    # Contract the K axis of both operands (x @ w.T) — no transpose in HBM.
    acc_ref[...] += jax.lax.dot_general(
        x_ref[...],
        w_ref[...],
        dimension_numbers=(((1,), (1,)), ((), ())),
        preferred_element_type=jnp.float32,
    )

    @pl.when(pl.program_id(2) == pl.num_programs(2) - 1)
    def _():
        o_ref[...] = acc_ref[...].astype(o_ref.dtype)


def _select_tiles(M: int, K: int, V: int):
    """Bounded, hardware-aligned tiles.

    - tm as large as the VMEM budget allows (minimizes full-weight re-reads:
      weight HBM traffic scales with M/tm), capped at 512, sublane-aligned.
    - tn = 512-wide vocab tiles -> wide, unmasked lane-dense output stores and
      fewer grid steps over V; lane-aligned (multiple of 128).
    - tk up to 2048 so the 256-wide MXUs of v6e/v7x stay fed.
    bf16 working set at the caps: 2*(tm*tk) + 2*(tn*tk) + 2*(tm*tn*4) + acc
    ~= 11 MiB, comfortably under the 32 MiB scoped VMEM limit.
    """
    tm = min(_round_up(M, 8), 512)
    tn = min(_round_up(V, 128), 512)
    tk = min(_round_up(K, 128), 2048)
    return tm, tn, tk


def lm_head_matmul(x2d, w_vh, *, tm, tn, tk, out_dtype):
    """x2d: [M, K] bf16 tokens; w_vh: [V, K] bf16 (native lm_head.weight
    layout).  Shapes must already be padded to tile multiples.  Returns
    [M, V] logits in `out_dtype`."""
    M, K = x2d.shape
    V, K2 = w_vh.shape
    assert K == K2
    assert M % tm == 0 and V % tn == 0 and K % tk == 0

    grid = (M // tm, V // tn, K // tk)
    out_bytes = jnp.dtype(out_dtype).itemsize
    cost = pl.CostEstimate(
        flops=2 * M * K * V,
        transcendentals=0,
        bytes_accessed=(grid[0] * V * K * 2)  # weight re-streamed per M tile
        + (M * K * 2)
        + (M * V * out_bytes),
    )

    return pl.pallas_call(
        _lm_head_kernel,
        out_shape=jax.ShapeDtypeStruct((M, V), out_dtype),
        grid_spec=pltpu.PrefetchScalarGridSpec(
            num_scalar_prefetch=0,
            grid=grid,
            in_specs=[
                pl.BlockSpec((tm, tk), lambda i, j, k: (i, k)),
                pl.BlockSpec((tn, tk), lambda i, j, k: (j, k)),  # W in [V, H]
            ],
            out_specs=pl.BlockSpec((tm, tn), lambda i, j, k: (i, j)),
            scratch_shapes=[pltpu.VMEM((tm, tn), jnp.float32)],
        ),
        compiler_params=pltpu.CompilerParams(
            dimension_semantics=("parallel", "parallel", "arbitrary"),
            vmem_limit_bytes=32 * 1024 * 1024,
        ),
        cost_estimate=cost,
    )(x2d, w_vh)


@functools.partial(jax.jit, static_argnames=("out_dtype",))
def stage2_forward(hidden_states, lm_head_weight, out_dtype=None):
    """hidden_states: [B, S, H]; lm_head_weight: [V, H] (PyTorch Linear
    layout, no bias).  Returns logits [B, S, V]."""
    B, S, H = hidden_states.shape
    V, H2 = lm_head_weight.shape
    assert H == H2
    if out_dtype is None:
        out_dtype = hidden_states.dtype  # keep original forward semantics
    M = B * S

    tm, tn, tk = _select_tiles(M, H, V)
    Mp, Kp, Vp = _round_up(M, tm), _round_up(H, tk), _round_up(V, tn)

    # bf16 operands for the MXU / halved HBM traffic.  In production, store
    # the weight persistently as bf16 [V, H] so this cast+pad is done once.
    x2d = hidden_states.reshape(M, H).astype(jnp.bfloat16)
    w = lm_head_weight.astype(jnp.bfloat16)
    if (Mp, Kp) != (M, H):
        x2d = jnp.pad(x2d, ((0, Mp - M), (0, Kp - H)))
    if (Vp, Kp) != (V, H):
        w = jnp.pad(w, ((0, Vp - V), (0, Kp - H)))

    logits2d = lm_head_matmul(x2d, w, tm=tm, tn=tn, tk=tk, out_dtype=out_dtype)
    return logits2d[:M, :V].reshape(B, S, V)


if __name__ == "__main__":
    # Small, deterministic synthetic config (stand-in for a real LM head):
    batch, seq, hidden, vocab = 2, 8, 32, 256

    key = jax.random.PRNGKey(0)
    kx, kw = jax.random.split(key)
    hidden_states = jax.random.normal(kx, (batch, seq, hidden), dtype=jnp.float32)
    # Deterministic init of lm_head.weight ([vocab, hidden], no bias).
    lm_head_weight = 0.02 * jax.random.normal(kw, (vocab, hidden), dtype=jnp.float32)

    logits = stage2_forward(hidden_states, lm_head_weight)
    jax.block_until_ready(logits)
    assert logits.shape == (batch, seq, vocab)
    assert logits.dtype == hidden_states.dtype

    # Reference 1: exact-precision einsum on the same bf16-cast operands
    # (kernel accumulates the bf16 products in f32) -> tight tolerance.
    ref_bf16 = jnp.einsum(
        "bsh,vh->bsv",
        hidden_states.astype(jnp.bfloat16).astype(jnp.float32),
        lm_head_weight.astype(jnp.bfloat16).astype(jnp.float32),
        precision=jax.lax.Precision.HIGHEST,
    )
    assert jnp.allclose(logits, ref_bf16, atol=1e-3, rtol=1e-3)

    # Reference 2: full-f32 reference -> loose tolerance (bf16 operand cast).
    ref_f32 = jnp.einsum(
        "bsh,vh->bsv",
        hidden_states,
        lm_head_weight,
        precision=jax.lax.Precision.HIGHEST,
    )
    assert jnp.allclose(logits, ref_f32, atol=5e-2, rtol=5e-2)

    print("KERNEL_OK")
</pallas_src>

<mosaic_0001>
module attributes {stable_mosaic.version = 11 : i64} {
  func.func @_lm_head_kernel(%arg0: i32, %arg1: i32, %arg2: i32, %arg3: memref<16x128xbf16, #tpu.memory_space<vmem>>, %arg4: memref<256x128xbf16, #tpu.memory_space<vmem>>, %arg5: memref<16x256xf32, #tpu.memory_space<vmem>>, %arg6: memref<16x256xf32, #tpu.memory_space<vmem>>) attributes {dimension_semantics = [#tpu.dimension_semantics<parallel>, #tpu.dimension_semantics<parallel>, #tpu.dimension_semantics<arbitrary>], iteration_bounds = array<i64: 1, 1, 1>, scalar_prefetch = 0 : i64, scratch_operands = 1 : i64, tpu.core_type = #tpu.core_type<tc>, window_params = [{transform_indices = @transform_0, window_bounds = array<i64: 16, 128>}, {transform_indices = @transform_1, window_bounds = array<i64: 256, 128>}, {transform_indices = @transform_2, window_bounds = array<i64: 16, 256>}]} {
    %c0_i32 = arith.constant 0 : i32
    %0 = arith.cmpi eq, %arg2, %c0_i32 : i32
    %1 = arith.extui %0 : i1 to i32
    %c0_i32_0 = arith.constant 0 : i32
    %2 = arith.cmpi ne, %1, %c0_i32_0 : i32
    scf.if %2 {
      %cst_10 = arith.constant 0.000000e+00 : f32
      %12 = vector.broadcast %cst_10 : f32 to vector<16x256xf32>
      %c0_11 = arith.constant 0 : index
      %c0_12 = arith.constant 0 : index
      %13 = vector.load %arg6[%c0_11, %c0_12] : memref<16x256xf32, #tpu.memory_space<vmem>>, vector<16x256xf32>
      tpu.vector_store %arg6[%c0_11, %c0_12], %12 {strides = array<i32>} : memref<16x256xf32, #tpu.memory_space<vmem>>, vector<16x256xf32>,
    } else {
    }
    %c0 = arith.constant 0 : index
    %c0_1 = arith.constant 0 : index
    %3 = vector.load %arg6[%c0, %c0_1] : memref<16x256xf32, #tpu.memory_space<vmem>>, vector<16x256xf32>
    %c0_2 = arith.constant 0 : index
    %c0_3 = arith.constant 0 : index
    %4 = vector.load %arg3[%c0_2, %c0_3] : memref<16x128xbf16, #tpu.memory_space<vmem>>, vector<16x128xbf16>
    %c0_4 = arith.constant 0 : index
    %c0_5 = arith.constant 0 : index
    %5 = vector.load %arg4[%c0_4, %c0_5] : memref<256x128xbf16, #tpu.memory_space<vmem>>, vector<256x128xbf16>
    %cst = arith.constant dense<0.000000e+00> : vector<16x256xf32>
    %6 = tpu.matmul %4, %5, %cst {dimension_numbers = #tpu.dot_dimension_numbers<[1], [1], [0], [0], [0, 0, 1, 0], [], []>} : vector<16x128xbf16>, vector<256x128xbf16>, vector<16x256xf32> -> vector<16x256xf32>
    %7 = arith.addf %3, %6 : vector<16x256xf32>
    %c0_6 = arith.constant 0 : index
    %c0_7 = arith.constant 0 : index
    %8 = vector.load %arg6[%c0_6, %c0_7] : memref<16x256xf32, #tpu.memory_space<vmem>>, vector<16x256xf32>
    tpu.vector_store %arg6[%c0_6, %c0_7], %7 {strides = array<i32>} : memref<16x256xf32, #tpu.memory_space<vmem>>, vector<16x256xf32>,
    %c0_i32_8 = arith.constant 0 : i32
    %9 = arith.cmpi eq, %arg2, %c0_i32_8 : i32
    %10 = arith.extui %9 : i1 to i32
    %c0_i32_9 = arith.constant 0 : i32
    %11 = arith.cmpi ne, %10, %c0_i32_9 : i32
    scf.if %11 {
      %c0_10 = arith.constant 0 : index
      %c0_11 = arith.constant 0 : index
      %12 = vector.load %arg6[%c0_10, %c0_11] : memref<16x256xf32, #tpu.memory_space<vmem>>, vector<16x256xf32>
      %c0_12 = arith.constant 0 : index
      %c0_13 = arith.constant 0 : index
      %13 = vector.load %arg5[%c0_12, %c0_13] : memref<16x256xf32, #tpu.memory_space<vmem>>, vector<16x256xf32>
      tpu.vector_store %arg5[%c0_12, %c0_13], %12 {strides = array<i32>} : memref<16x256xf32, #tpu.memory_space<vmem>>, vector<16x256xf32>,
    } else {
    }
    return
  }
  func.func @transform_0(%arg0: i32, %arg1: i32, %arg2: i32) -> (i32, i32) {
    %c0_i32 = arith.constant 0 : i32
    return %arg0, %arg2 : i32, i32
  }
  func.func @transform_1(%arg0: i32, %arg1: i32, %arg2: i32) -> (i32, i32) {
    %c0_i32 = arith.constant 0 : i32
    return %arg1, %arg2 : i32, i32
  }
  func.func @transform_2(%arg0: i32, %arg1: i32, %arg2: i32) -> (i32, i32) {
    %c0_i32 = arith.constant 0 : i32
    return %arg0, %arg1 : i32, i32
  }
}

</mosaic_0001>

<llo_original>
// kernel: stage2_forward.1
$region0: #{stage2_forward.1}
  #allocation0 [shape = 'u32[]', space=smem, size = 0x4, offset = 0x4, fixed_abs, tag = 'smem constant byte address 0x4 - core index']
  #allocation1 [shape = 'u32[144,128]{1,0:T(1,128)}', space=vmem, size = 0x12000, scoped, tag = 'internal scratch']
  #allocation2 [shape = 'f32[16,256]{1,0:T(8,128)}', space=vmem, size = 0x4000, scoped, tag = 'scratch operand']
  %s0 = inlined_call_operand.vmem [shape: bf16[16,128], index: 0, kind: input, shape index: {}]
  %s1 = inlined_call_operand.vmem [shape: bf16[256,128], index: 1, kind: input, shape index: {}]
  %s2 = inlined_call_operand.hbm [shape: f32[16,256], index: 2, kind: output, shape index: {}]
  %s3 = sld [smem:[#allocation0]]
  $region26: #{stage2_forward.1} parent=0
    _
  %s5 = ssub.s32 1, %s3
  %s6 = scalar_select 0, %s5, %s3
  $region1: #{stage2_forward.1} parent=0
    #allocation3 [shape = 'u8[16384]{0}', space=vmem, size = 0x4000, scoped, tag = 'output window, operand 0, single buffered']
    #allocation4 [shape = 's32[1]{0}', space=sflag, size = 0x4, scoped, tag = 'scoped memory for stage2_forward.1']
    %7 = vsyncpa [#allocation4], 0
    // Predicated region
    $region2: #{stage2_forward.1} parent=1 // pred_check
      _
    $region3: #{stage2_forward.1} parent=1 // pred_check_branch
      %9 = sbr.rel (0) target = $region5
    $region4: #{stage2_forward.1} parent=1 // pred_region
      _
    $region5: #{stage2_forward.1} parent=1 // pred_fallthru
      _
    // Predicated region
    $region6: #{stage2_forward.1} parent=1 // pred_check
      _
    $region7: #{stage2_forward.1} parent=1 // pred_check_branch
      %11 = sbr.rel (0) target = $region9
    $region8: #{stage2_forward.1} parent=1 // pred_region
      _
    $region9: #{stage2_forward.1} parent=1 // pred_fallthru
      _
    %p13 = scmp.eq.s32.totalorder 0, 0
    // Predicated region
    $region10: #{stage2_forward.1} parent=1 // pred_check
      %p14 = pneg %p13
    $region11: #{stage2_forward.1} parent=1 // pred_check_branch
      %16 = sbr.rel (%p14) target = $region13
    $region12: #{stage2_forward.1} parent=1 // pred_region
      %17 = vst [vmem:[#allocation2] sm:$0xff] 0.0
      %18 = vst [vmem:[#allocation2 + $0x8] sm:$0xff] 0.0
      %19 = vst [vmem:[#allocation2 + $0x10] sm:$0xff] 0.0
      %20 = vst [vmem:[#allocation2 + $0x18] sm:$0xff] 0.0
    $region13: #{stage2_forward.1} parent=1 // pred_fallthru
      _
    %v21 = vld [vmem:[#allocation2] sm:$0xff]
    %v22 = vld [vmem:[#allocation2 + $0x8] sm:$0xff]
    %v23 = vld [vmem:[#allocation2 + $0x10] sm:$0xff]
    %v24 = vld [vmem:[#allocation2 + $0x18] sm:$0xff]
    %v25 = vld [vmem:[%s0] sm:$0xf]
    %v26 = vld [vmem:[%s0 + $0x4] sm:$0xf]
    %v27 = vld [vmem:[%s1] sm:$0xf]
    %v28 = vld [vmem:[%s1 + $0x4] sm:$0xf]
    %v29 = vld [vmem:[%s1 + $0x8] sm:$0xf]
    %v30 = vld [vmem:[%s1 + $0xc] sm:$0xf]
    %v31 = vld [vmem:[%s1 + $0x10] sm:$0xf]
    %v32 = vld [vmem:[%s1 + $0x14] sm:$0xf]
    %v33 = vld [vmem:[%s1 + $0x18] sm:$0xf]
    %v34 = vld [vmem:[%s1 + $0x1c] sm:$0xf]
    %v35 = vld [vmem:[%s1 + $0x20] sm:$0xf]
    %v36 = vld [vmem:[%s1 + $0x24] sm:$0xf]
    %v37 = vld [vmem:[%s1 + $0x28] sm:$0xf]
    %v38 = vld [vmem:[%s1 + $0x2c] sm:$0xf]
    %v39 = vld [vmem:[%s1 + $0x30] sm:$0xf]
    %v40 = vld [vmem:[%s1 + $0x34] sm:$0xf]
    %v41 = vld [vmem:[%s1 + $0x38] sm:$0xf]
    %v42 = vld [vmem:[%s1 + $0x3c] sm:$0xf]
    %v43 = vld [vmem:[%s1 + $0x40] sm:$0xf]
    %v44 = vld [vmem:[%s1 + $0x44] sm:$0xf]
    %v45 = vld [vmem:[%s1 + $0x48] sm:$0xf]
    %v46 = vld [vmem:[%s1 + $0x4c] sm:$0xf]
    %v47 = vld [vmem:[%s1 + $0x50] sm:$0xf]
    %v48 = vld [vmem:[%s1 + $0x54] sm:$0xf]
    %v49 = vld [vmem:[%s1 + $0x58] sm:$0xf]
    %v50 = vld [vmem:[%s1 + $0x5c] sm:$0xf]
    %v51 = vld [vmem:[%s1 + $0x60] sm:$0xf]
    %v52 = vld [vmem:[%s1 + $0x64] sm:$0xf]
    %v53 = vld [vmem:[%s1 + $0x68] sm:$0xf]
    %v54 = vld [vmem:[%s1 + $0x6c] sm:$0xf]
    %v55 = vld [vmem:[%s1 + $0x70] sm:$0xf]
    %v56 = vld [vmem:[%s1 + $0x74] sm:$0xf]
    %v57 = vld [vmem:[%s1 + $0x78] sm:$0xf]
    %v58 = vld [vmem:[%s1 + $0x7c] sm:$0xf]
    %v61 = vunpack.c.l.b16 %v25
    %v62 = vunpack.c.l.b16 %v26
    %v63 = vpack.c.b16 %v62, %v61
    %v97 = vunpack.c.l.b16 %v27
    %v98 = vunpack.c.l.b16 %v28
    %v99 = vunpack.c.l.b16 %v29
    %v100 = vunpack.c.l.b16 %v30
    %v101 = vunpack.c.l.b16 %v31
    %v102 = vunpack.c.l.b16 %v32
    %v103 = vunpack.c.l.b16 %v33
    %v104 = vunpack.c.l.b16 %v34
    %v105 = vunpack.c.l.b16 %v35
    %v106 = vunpack.c.l.b16 %v36
    %v107 = vunpack.c.l.b16 %v37
    %v108 = vunpack.c.l.b16 %v38
    %v109 = vunpack.c.l.b16 %v39
    %v110 = vunpack.c.l.b16 %v40
    %v111 = vunpack.c.l.b16 %v41
    %v112 = vunpack.c.l.b16 %v42
    %v113 = vunpack.c.l.b16 %v43
    %v114 = vunpack.c.l.b16 %v44
    %v115 = vunpack.c.l.b16 %v45
    %v116 = vunpack.c.l.b16 %v46
    %v117 = vunpack.c.l.b16 %v47
    %v118 = vunpack.c.l.b16 %v48
    %v119 = vunpack.c.l.b16 %v49
    %v120 = vunpack.c.l.b16 %v50
    %v121 = vunpack.c.l.b16 %v51
    %v122 = vunpack.c.l.b16 %v52
    %v123 = vunpack.c.l.b16 %v53
    %v124 = vunpack.c.l.b16 %v54
    %v125 = vunpack.c.l.b16 %v55
    %v126 = vunpack.c.l.b16 %v56
    %v127 = vunpack.c.l.b16 %v57
    %v128 = vunpack.c.l.b16 %v58
    %v129 = vpack.c.b16 %v98, %v97
    %v130 = vpack.c.b16 %v100, %v99
    %v131 = vpack.c.b16 %v102, %v101
    %v132 = vpack.c.b16 %v104, %v103
    %v133 = vpack.c.b16 %v106, %v105
    %v134 = vpack.c.b16 %v108, %v107
    %v135 = vpack.c.b16 %v110, %v109
    %v136 = vpack.c.b16 %v112, %v111
    %v137 = vpack.c.b16 %v114, %v113
    %v138 = vpack.c.b16 %v116, %v115
    %v139 = vpack.c.b16 %v118, %v117
    %v140 = vpack.c.b16 %v120, %v119
    %v141 = vpack.c.b16 %v122, %v121
    %v142 = vpack.c.b16 %v124, %v123
    %v143 = vpack.c.b16 %v126, %v125
    %v144 = vpack.c.b16 %v128, %v127
    %161 = vmatprep.subr.bf16.mxu0 0
    %162 = vmatpush1.bf16.xpose.msra.mxu0 %v129
    %163 = vmatprep.subr.bf16.mxu0 0
    %164 = vmatpush1.bf16.xpose.msra.mxu0 %v130
    %165 = vmatprep.subr.bf16.mxu0 0
    %166 = vmatpush1.bf16.xpose.msra.mxu0 %v131
    %167 = vmatprep.subr.bf16.mxu0 0
    %168 = vmatpush1.bf16.xpose.msra.mxu0 %v132
    %169 = vmatprep.subr.bf16.mxu0 0
    %170 = vmatpush1.bf16.xpose.msra.mxu0 %v133
    %171 = vmatprep.subr.bf16.mxu0 0
    %172 = vmatpush1.bf16.xpose.msra.mxu0 %v134
    %173 = vmatprep.subr.bf16.mxu0 0
    %174 = vmatpush1.bf16.xpose.msra.mxu0 %v135
    %175 = vmatprep.subr.bf16.mxu0 0
    %176 = vmatpush1.bf16.xpose.msra.mxu0 %v136
    %177 = vmatprep.subr.bf16.mxu0 0
    %178 = vmatpush1.bf16.xpose.msra.mxu0 %v137
    %179 = vmatprep.subr.bf16.mxu0 0
    %180 = vmatpush1.bf16.xpose.msra.mxu0 %v138
    %181 = vmatprep.subr.bf16.mxu0 0
    %182 = vmatpush1.bf16.xpose.msra.mxu0 %v139
    %183 = vmatprep.subr.bf16.mxu0 0
    %184 = vmatpush1.bf16.xpose.msra.mxu0 %v140
    %185 = vmatprep.subr.bf16.mxu0 0
    %186 = vmatpush1.bf16.xpose.msra.mxu0 %v141
    %187 = vmatprep.subr.bf16.mxu0 0
    %188 = vmatpush1.bf16.xpose.msra.mxu0 %v142
    %189 = vmatprep.subr.bf16.mxu0 0
    %190 = vmatpush1.bf16.xpose.msra.mxu0 %v143
    %191 = vmatprep.subr.bf16.mxu0 0
    %192 = vmatpush1.bf16.xpose.msra.mxu0 %v144
    %193 = vmatprep.mubr.bf16.mxu0 0
    %194 = vmatmul.mubr.bf16.gmra.mrb[0].mxu0 %v63
    %v195 = vpop.f32.mrb[0].mxu0
    %v196 = vadd.f32 0.0, %v195
    %v197 = vpop.f32.mrb[0].mxu0
    %v198 = vadd.f32 0.0, %v197
    %v199 = vpop.f32.mrb[0].mxu0
    %v200 = vadd.f32 0.0, %v199
    %v201 = vpop.f32.mrb[0].mxu0
    %v202 = vadd.f32 0.0, %v201
    %203 = vdwg.mxu0
    %v204 = vadd.f32 %v21, %v196
    %v205 = vadd.f32 %v22, %v198
    %v206 = vadd.f32 %v23, %v200
    %v207 = vadd.f32 %v24, %v202
    %208 = vst [vmem:[#allocation2] sm:$0xff] %v204
    %209 = vst [vmem:[#allocation2 + $0x8] sm:$0xff] %v205
    %210 = vst [vmem:[#allocation2 + $0x10] sm:$0xff] %v206
    %211 = vst [vmem:[#allocation2 + $0x18] sm:$0xff] %v207
    // Predicated region
    $region14: #{stage2_forward.1} parent=1 // pred_check
      %p212 = pneg %p13
    $region15: #{stage2_forward.1} parent=1 // pred_check_branch
      %214 = sbr.rel (%p212) target = $region17
    $region16: #{stage2_forward.1} parent=1 // pred_region
      %v215 = vld [vmem:[#allocation2] sm:$0xff]
      %v216 = vld [vmem:[#allocation2 + $0x8] sm:$0xff]
      %v217 = vld [vmem:[#allocation2 + $0x10] sm:$0xff]
      %v218 = vld [vmem:[#allocation2 + $0x18] sm:$0xff]
      %219 = vst [vmem:[#allocation3] sm:$0xff] %v215
      %220 = vst [vmem:[#allocation3 + $0x8] sm:$0xff] %v216
      %221 = vst [vmem:[#allocation3 + $0x10] sm:$0xff] %v217
      %222 = vst [vmem:[#allocation3 + $0x18] sm:$0xff] %v218
    $region17: #{stage2_forward.1} parent=1 // pred_fallthru
      _
    // Predicated region
    $region18: #{stage2_forward.1} parent=1 // pred_check
      _
    $region19: #{stage2_forward.1} parent=1 // pred_check_branch
      %224 = sbr.rel (0) target = $region21
    $region20: #{stage2_forward.1} parent=1 // pred_region
      %s226 = ssub.s32 512, 512
      %227 = vsyncadd [#allocation4], %s226
      %s228 = sshll.u32 [#allocation3], 4
      %s229 = int_to_ptr.vmem [resolvable:$true] %s228
      %234 = dma.vmem_to_hbm [thread:$0]  %s229, 512, %s2, [#allocation4], 256, 256, 16
    $region21: #{stage2_forward.1} parent=1 // pred_fallthru
      _
    // Predicated region
    $region22: #{stage2_forward.1} parent=1 // pred_check
      _
    $region23: #{stage2_forward.1} parent=1 // pred_check_branch
      %236 = sbr.rel (0) target = $region25
    $region24: #{stage2_forward.1} parent=1 // pred_region
      %237 = dma.done [#allocation4], 512
    $region25: #{stage2_forward.1} parent=1 // pred_fallthru
      _
    %238 = vsyncpa [#allocation4], 1

</llo_original>
